<compile_context>
chip_gen: v5e
topology: v5e:2x2
jax: 0.10.0
libtpu: 0.0.40
codegen_flags: <defaults>
</compile_context>

<pallas_src>
import jax
import jax.numpy as jnp
from jax import lax
from jax.experimental import pallas as pl
from jax.experimental.pallas import tpu as pltpu


def _make_rnn_kernel(Tb, T, unroll):
    """Kernel processing Tb consecutive time steps per grid invocation."""
    ragged = (T % Tb) != 0

    def rnn_kernel(px_ref, h0_ref, wh_ref, out_ref, hT_ref,
                   h_scr, px_scr, o_scr):
        blk = pl.program_id(0)

        @pl.when(blk == 0)
        def _():
            h_scr[...] = h0_ref[...]          # f32 carried hidden state

        # One in-VMEM layout swap per block: batch-major HBM block (Bp,Tb,Hp)
        # -> time-major staging (Tb,Bp,Hp).  The hot loop then only uses
        # leading-dim dynamic indexing.
        px_scr[...] = jnp.transpose(px_ref[...], (1, 0, 2))

        def step(i, h_prev):
            # Only the h @ W_h recurrence is on the sequential critical path;
            # the input projection + bias were precomputed into px (bf16).
            px = px_scr[i].astype(jnp.float32)
            pre = px + jnp.dot(h_prev, wh_ref[...],
                               preferred_element_type=jnp.float32)
            h_new = jnp.tanh(pre)
            if ragged:  # only emitted when T % Tb != 0
                t = blk * Tb + i
                h_new = jnp.where(t < T, h_new, h_prev)
            o_scr[i] = h_new.astype(o_scr.dtype)
            return h_new

        h_last = lax.fori_loop(0, Tb, step, h_scr[...], unroll=unroll)
        h_scr[...] = h_last

        # Single in-VMEM swap back to batch-major; the HBM output then needs
        # no wrapper-side transpose pass.
        out_ref[...] = jnp.transpose(o_scr[...], (1, 0, 2))

        @pl.when(blk == pl.num_programs(0) - 1)
        def _():
            hT_ref[...] = h_last.astype(hT_ref.dtype)

    return rnn_kernel


def stateful_rnn_layer(x, w_full, b, hidden_dim, h0=None, time_block=32):
    """x: (B, T, D); w_full: (H, D+H) (PyTorch Linear layout); b: (H,).

    Returns (out_seq (B, T, H), h_final (B, H)) — same semantics as the
    PyTorch StatefulRNNLayer.forward.
    """
    B, T, D = x.shape
    H = hidden_dim
    out_dtype = x.dtype
    itemsize = jnp.dtype(out_dtype).itemsize

    Hp = max(128, ((H + 127) // 128) * 128)   # lane-dense hidden width
    Bp = max(8, ((B + 7) // 8) * 8)           # sublane-dense batch

    if h0 is None:
        h0 = jnp.zeros((B, H), x.dtype)

    # Split the concatenated Linear weight: [x_t, h] @ W^T = x_t @ Wx + h @ Wh
    wx = jnp.transpose(w_full[:, :D]).astype(jnp.float32)   # (D, H)
    wh = jnp.transpose(w_full[:, D:]).astype(jnp.float32)   # (H, H)

    # Zero padding is exact: padded W/b columns are zero so padded h columns
    # stay identically 0, and padded W_h rows are zero so they never feed
    # back into the real columns.  Padded batch rows never mix across batch.
    wx_p = jnp.zeros((D, Hp), jnp.float32).at[:, :H].set(wx)
    wh_p = jnp.zeros((Hp, Hp), jnp.float32).at[:H, :H].set(wh)
    b_p = jnp.zeros((1, 1, Hp), jnp.float32).at[0, 0, :H].set(b.astype(jnp.float32))
    h0_p = jnp.zeros((Bp, Hp), jnp.float32).at[:B, :H].set(h0.astype(jnp.float32))

    # Size Tb against a conservative VMEM budget (double-buffered px/out blocks
    # + resident W_h/h0/hT + staging scratches), targeting ~40 MiB so it fits
    # v7x's 64 MiB physical VMEM with headroom (plenty on v5e/v6e's 128 MiB).
    def vmem_bytes(tb):
        px_blk = Bp * tb * Hp * 2            # bf16 stream
        out_blk = Bp * tb * Hp * itemsize
        resident = 2 * Hp * Hp * 4 + 2 * Bp * Hp * 4 + 2 * Bp * Hp * itemsize
        scratch = Bp * Hp * 4 + Bp * tb * Hp * 2 + Bp * tb * Hp * itemsize
        return 2 * px_blk + 2 * out_blk + resident + scratch

    VMEM_TARGET = 40 << 20
    Tb = max(1, min(time_block, T))
    while Tb > 1 and vmem_bytes(Tb) > VMEM_TARGET:
        Tb //= 2

    num_blocks = pl.cdiv(T, Tb)
    Tpad = num_blocks * Tb

    # Hoisted, time-independent input projection: one large f32 matmul emitted
    # batch-major (no transpose pass anywhere), then cast once to bf16 for
    # HBM streaming into the kernel.
    xb = jnp.zeros((Bp, T, D), jnp.float32).at[:B].set(x.astype(jnp.float32))
    pre = jnp.einsum("btd,dh->bth", xb, wx_p) + b_p          # (Bp, T, Hp) f32
    if Tpad > T:
        pre = jnp.pad(pre, ((0, 0), (0, Tpad - T), (0, 0)))  # robust ragged tail
    pre_bf16 = pre.astype(jnp.bfloat16)

    unroll = min(Tb, 8)   # bounded unroll: scheduling visibility w/o vreg spill

    out_p, hT_p = pl.pallas_call(
        _make_rnn_kernel(Tb, T, unroll),
        out_shape=(
            jax.ShapeDtypeStruct((Bp, Tpad, Hp), out_dtype),
            jax.ShapeDtypeStruct((Bp, Hp), out_dtype),
        ),
        grid_spec=pltpu.PrefetchScalarGridSpec(
            num_scalar_prefetch=0,
            grid=(num_blocks,),
            in_specs=[
                pl.BlockSpec((Bp, Tb, Hp), lambda i: (0, i, 0)),  # pre_x (bf16)
                pl.BlockSpec((Bp, Hp), lambda i: (0, 0)),         # h0 (f32)
                pl.BlockSpec((Hp, Hp), lambda i: (0, 0)),         # W_h (f32)
            ],
            out_specs=(
                pl.BlockSpec((Bp, Tb, Hp), lambda i: (0, i, 0)),  # out block
                pl.BlockSpec((Bp, Hp), lambda i: (0, 0)),         # final hidden
            ),
            scratch_shapes=[
                pltpu.VMEM((Bp, Hp), jnp.float32),        # carried hidden (f32)
                pltpu.VMEM((Tb, Bp, Hp), jnp.bfloat16),   # time-major px staging
                pltpu.VMEM((Tb, Bp, Hp), out_dtype),      # time-major out staging
            ],
        ),
        compiler_params=pltpu.CompilerParams(
            dimension_semantics=("arbitrary",),   # sequential recurrence
            vmem_limit_bytes=48 << 20,            # above 16/32 MiB defaults, < v7x physical
        ),
    )(pre_bf16, h0_p, wh_p)

    out_seq = out_p[:B, :T, :H]
    h_final = hT_p[:B, :H]
    return out_seq, h_final


def rnn_reference(x, w_full, b, hidden_dim, h0=None):
    """Pure-JAX f32 reference mirroring the PyTorch forward."""
    B, T, D = x.shape
    H = hidden_dim
    h = jnp.zeros((B, H), x.dtype) if h0 is None else h0
    outs = []
    for t in range(T):
        cat = jnp.concatenate([x[:, t, :], h], axis=1)
        h = jnp.tanh(cat @ w_full.T + b)
        outs.append(h[:, None, :])
    return jnp.concatenate(outs, axis=1), h


if __name__ == "__main__":
    B, T, D, H = 2, 8, 4, 32

    key = jax.random.PRNGKey(0)
    kx, kw, kb = jax.random.split(key, 3)

    # Deterministic parameter init (PyTorch Linear-style uniform bound).
    fan_in = D + H
    bound = 1.0 / (fan_in ** 0.5)
    w_full = jax.random.uniform(kw, (H, D + H), jnp.float32, -bound, bound)
    b = jax.random.uniform(kb, (H,), jnp.float32, -bound, bound)

    x = jax.random.normal(kx, (B, T, D), jnp.float32)

    out_seq, h_final = stateful_rnn_layer(x, w_full, b, H, h0=None)
    jax.block_until_ready((out_seq, h_final))

    ref_seq, ref_h = rnn_reference(x, w_full, b, H, h0=None)
    assert out_seq.shape == (B, T, H) and h_final.shape == (B, H)
    # Tolerance covers the bf16-streamed pre-activation; the recurrent matmul,
    # add, tanh and carried state are all f32.
    assert jnp.allclose(out_seq, ref_seq, atol=2e-2, rtol=2e-2)
    assert jnp.allclose(h_final, ref_h, atol=2e-2, rtol=2e-2)

    print("KERNEL_OK")
</pallas_src>

<mosaic_0001>
module attributes {stable_mosaic.version = 11 : i64} {
  func.func @rnn_kernel(%arg0: i32, %arg1: memref<8x8x128xbf16, #tpu.memory_space<vmem>>, %arg2: memref<8x128xf32, #tpu.memory_space<vmem>>, %arg3: memref<128x128xf32, #tpu.memory_space<vmem>>, %arg4: memref<8x8x128xf32, #tpu.memory_space<vmem>>, %arg5: memref<8x128xf32, #tpu.memory_space<vmem>>, %arg6: memref<8x128xf32, #tpu.memory_space<vmem>>, %arg7: memref<8x8x128xbf16, #tpu.memory_space<vmem>>, %arg8: memref<8x8x128xf32, #tpu.memory_space<vmem>>) attributes {dimension_semantics = [#tpu.dimension_semantics<arbitrary>], iteration_bounds = array<i64: 1>, scalar_prefetch = 0 : i64, scratch_operands = 3 : i64, tpu.core_type = #tpu.core_type<tc>, window_params = [{transform_indices = @transform_0, window_bounds = array<i64: 8, 8, 128>}, {pipeline_mode = #tpu.pipeline_mode<synchronous>, transform_indices = @transform_1, window_bounds = array<i64: 8, 128>}, {pipeline_mode = #tpu.pipeline_mode<synchronous>, transform_indices = @transform_2, window_bounds = array<i64: 128, 128>}, {transform_indices = @transform_3, window_bounds = array<i64: 8, 8, 128>}, {pipeline_mode = #tpu.pipeline_mode<synchronous>, transform_indices = @transform_4, window_bounds = array<i64: 8, 128>}]} {
    %c0_i32 = arith.constant 0 : i32
    %0 = arith.cmpi eq, %arg0, %c0_i32 : i32
    %1 = arith.extui %0 : i1 to i32
    %c0_i32_0 = arith.constant 0 : i32
    %2 = arith.cmpi ne, %1, %c0_i32_0 : i32
    scf.if %2 {
      %c0_74 = arith.constant 0 : index
      %c0_75 = arith.constant 0 : index
      %110 = vector.load %arg2[%c0_74, %c0_75] : memref<8x128xf32, #tpu.memory_space<vmem>>, vector<8x128xf32>
      %c0_76 = arith.constant 0 : index
      %c0_77 = arith.constant 0 : index
      %111 = vector.load %arg6[%c0_76, %c0_77] : memref<8x128xf32, #tpu.memory_space<vmem>>, vector<8x128xf32>
      tpu.vector_store %arg6[%c0_76, %c0_77], %110 {strides = array<i32>} : memref<8x128xf32, #tpu.memory_space<vmem>>, vector<8x128xf32>,
    } else {
    }
    %c0 = arith.constant 0 : index
    %c0_1 = arith.constant 0 : index
    %c0_2 = arith.constant 0 : index
    %3 = vector.load %arg1[%c0, %c0_1, %c0_2] : memref<8x8x128xbf16, #tpu.memory_space<vmem>>, vector<8x8x128xbf16>
    %4 = tpu.transpose %3, [1, 0, 2] : vector<8x8x128xbf16> -> vector<8x8x128xbf16>
    %c0_3 = arith.constant 0 : index
    %c0_4 = arith.constant 0 : index
    %c0_5 = arith.constant 0 : index
    %5 = vector.load %arg7[%c0_3, %c0_4, %c0_5] : memref<8x8x128xbf16, #tpu.memory_space<vmem>>, vector<8x8x128xbf16>
    tpu.vector_store %arg7[%c0_3, %c0_4, %c0_5], %4 {strides = array<i32>} : memref<8x8x128xbf16, #tpu.memory_space<vmem>>, vector<8x8x128xbf16>,
    %c0_6 = arith.constant 0 : index
    %c0_7 = arith.constant 0 : index
    %6 = vector.load %arg6[%c0_6, %c0_7] : memref<8x128xf32, #tpu.memory_space<vmem>>, vector<8x128xf32>
    %c0_i32_8 = arith.constant 0 : i32
    %7 = arith.index_cast %c0_i32_8 : i32 to index
    %c0_9 = arith.constant 0 : index
    %c0_10 = arith.constant 0 : index
    %8 = vector.load %arg7[%7, %c0_9, %c0_10] : memref<8x8x128xbf16, #tpu.memory_space<vmem>>, vector<1x8x128xbf16>
    %9 = vector.shape_cast %8 : vector<1x8x128xbf16> to vector<8x128xbf16>
    %10 = arith.extf %9 : vector<8x128xbf16> to vector<8x128xf32>
    %c0_11 = arith.constant 0 : index
    %c0_12 = arith.constant 0 : index
    %11 = vector.load %arg3[%c0_11, %c0_12] : memref<128x128xf32, #tpu.memory_space<vmem>>, vector<128x128xf32>
    %cst = arith.constant dense<0.000000e+00> : vector<8x128xf32>
    %12 = tpu.matmul %6, %11, %cst {dimension_numbers = #tpu.dot_dimension_numbers<[1], [0], [0], [1], [0, 0, 1, 1], [], []>} : vector<8x128xf32>, vector<128x128xf32>, vector<8x128xf32> -> vector<8x128xf32>
    %13 = arith.addf %10, %12 : vector<8x128xf32>
    %14 = math.tanh %13 : vector<8x128xf32>
    %15 = arith.index_cast %c0_i32_8 : i32 to index
    %c0_13 = arith.constant 0 : index
    %c0_14 = arith.constant 0 : index
    %16 = vector.load %arg8[%15, %c0_13, %c0_14] : memref<8x8x128xf32, #tpu.memory_space<vmem>>, vector<1x8x128xf32>
    %17 = vector.shape_cast %16 : vector<1x8x128xf32> to vector<8x128xf32>
    %18 = vector.shape_cast %14 : vector<8x128xf32> to vector<1x8x128xf32>
    tpu.vector_store %arg8[%15, %c0_13, %c0_14], %18 {strides = array<i32>} : memref<8x8x128xf32, #tpu.memory_space<vmem>>, vector<1x8x128xf32>,
    %c1_i32 = arith.constant 1 : i32
    %19 = arith.index_cast %c1_i32 : i32 to index
    %c0_15 = arith.constant 0 : index
    %c0_16 = arith.constant 0 : index
    %20 = vector.load %arg7[%19, %c0_15, %c0_16] : memref<8x8x128xbf16, #tpu.memory_space<vmem>>, vector<1x8x128xbf16>
    %21 = vector.shape_cast %20 : vector<1x8x128xbf16> to vector<8x128xbf16>
    %22 = arith.extf %21 : vector<8x128xbf16> to vector<8x128xf32>
    %c0_17 = arith.constant 0 : index
    %c0_18 = arith.constant 0 : index
    %23 = vector.load %arg3[%c0_17, %c0_18] : memref<128x128xf32, #tpu.memory_space<vmem>>, vector<128x128xf32>
    %cst_19 = arith.constant dense<0.000000e+00> : vector<8x128xf32>
    %24 = tpu.matmul %14, %23, %cst_19 {dimension_numbers = #tpu.dot_dimension_numbers<[1], [0], [0], [1], [0, 0, 1, 1], [], []>} : vector<8x128xf32>, vector<128x128xf32>, vector<8x128xf32> -> vector<8x128xf32>
    %25 = arith.addf %22, %24 : vector<8x128xf32>
    %26 = math.tanh %25 : vector<8x128xf32>
    %27 = arith.index_cast %c1_i32 : i32 to index
    %c0_20 = arith.constant 0 : index
    %c0_21 = arith.constant 0 : index
    %28 = vector.load %arg8[%27, %c0_20, %c0_21] : memref<8x8x128xf32, #tpu.memory_space<vmem>>, vector<1x8x128xf32>
    %29 = vector.shape_cast %28 : vector<1x8x128xf32> to vector<8x128xf32>
    %30 = vector.shape_cast %26 : vector<8x128xf32> to vector<1x8x128xf32>
    tpu.vector_store %arg8[%27, %c0_20, %c0_21], %30 {strides = array<i32>} : memref<8x8x128xf32, #tpu.memory_space<vmem>>, vector<1x8x128xf32>,
    %c2_i32 = arith.constant 2 : i32
    %31 = arith.index_cast %c2_i32 : i32 to index
    %c0_22 = arith.constant 0 : index
    %c0_23 = arith.constant 0 : index
    %32 = vector.load %arg7[%31, %c0_22, %c0_23] : memref<8x8x128xbf16, #tpu.memory_space<vmem>>, vector<1x8x128xbf16>
    %33 = vector.shape_cast %32 : vector<1x8x128xbf16> to vector<8x128xbf16>
    %34 = arith.extf %33 : vector<8x128xbf16> to vector<8x128xf32>
    %c0_24 = arith.constant 0 : index
    %c0_25 = arith.constant 0 : index
    %35 = vector.load %arg3[%c0_24, %c0_25] : memref<128x128xf32, #tpu.memory_space<vmem>>, vector<128x128xf32>
    %cst_26 = arith.constant dense<0.000000e+00> : vector<8x128xf32>
    %36 = tpu.matmul %26, %35, %cst_26 {dimension_numbers = #tpu.dot_dimension_numbers<[1], [0], [0], [1], [0, 0, 1, 1], [], []>} : vector<8x128xf32>, vector<128x128xf32>, vector<8x128xf32> -> vector<8x128xf32>
    %37 = arith.addf %34, %36 : vector<8x128xf32>
    %38 = math.tanh %37 : vector<8x128xf32>
    %39 = arith.index_cast %c2_i32 : i32 to index
    %c0_27 = arith.constant 0 : index
    %c0_28 = arith.constant 0 : index
    %40 = vector.load %arg8[%39, %c0_27, %c0_28] : memref<8x8x128xf32, #tpu.memory_space<vmem>>, vector<1x8x128xf32>
    %41 = vector.shape_cast %40 : vector<1x8x128xf32> to vector<8x128xf32>
    %42 = vector.shape_cast %38 : vector<8x128xf32> to vector<1x8x128xf32>
    tpu.vector_store %arg8[%39, %c0_27, %c0_28], %42 {strides = array<i32>} : memref<8x8x128xf32, #tpu.memory_space<vmem>>, vector<1x8x128xf32>,
    %c3_i32 = arith.constant 3 : i32
    %43 = arith.index_cast %c3_i32 : i32 to index
    %c0_29 = arith.constant 0 : index
    %c0_30 = arith.constant 0 : index
    %44 = vector.load %arg7[%43, %c0_29, %c0_30] : memref<8x8x128xbf16, #tpu.memory_space<vmem>>, vector<1x8x128xbf16>
    %45 = vector.shape_cast %44 : vector<1x8x128xbf16> to vector<8x128xbf16>
    %46 = arith.extf %45 : vector<8x128xbf16> to vector<8x128xf32>
    %c0_31 = arith.constant 0 : index
    %c0_32 = arith.constant 0 : index
    %47 = vector.load %arg3[%c0_31, %c0_32] : memref<128x128xf32, #tpu.memory_space<vmem>>, vector<128x128xf32>
    %cst_33 = arith.constant dense<0.000000e+00> : vector<8x128xf32>
    %48 = tpu.matmul %38, %47, %cst_33 {dimension_numbers = #tpu.dot_dimension_numbers<[1], [0], [0], [1], [0, 0, 1, 1], [], []>} : vector<8x128xf32>, vector<128x128xf32>, vector<8x128xf32> -> vector<8x128xf32>
    %49 = arith.addf %46, %48 : vector<8x128xf32>
    %50 = math.tanh %49 : vector<8x128xf32>
    %51 = arith.index_cast %c3_i32 : i32 to index
    %c0_34 = arith.constant 0 : index
    %c0_35 = arith.constant 0 : index
    %52 = vector.load %arg8[%51, %c0_34, %c0_35] : memref<8x8x128xf32, #tpu.memory_space<vmem>>, vector<1x8x128xf32>
    %53 = vector.shape_cast %52 : vector<1x8x128xf32> to vector<8x128xf32>
    %54 = vector.shape_cast %50 : vector<8x128xf32> to vector<1x8x128xf32>
    tpu.vector_store %arg8[%51, %c0_34, %c0_35], %54 {strides = array<i32>} : memref<8x8x128xf32, #tpu.memory_space<vmem>>, vector<1x8x128xf32>,
    %c4_i32 = arith.constant 4 : i32
    %55 = arith.index_cast %c4_i32 : i32 to index
    %c0_36 = arith.constant 0 : index
    %c0_37 = arith.constant 0 : index
    %56 = vector.load %arg7[%55, %c0_36, %c0_37] : memref<8x8x128xbf16, #tpu.memory_space<vmem>>, vector<1x8x128xbf16>
    %57 = vector.shape_cast %56 : vector<1x8x128xbf16> to vector<8x128xbf16>
    %58 = arith.extf %57 : vector<8x128xbf16> to vector<8x128xf32>
    %c0_38 = arith.constant 0 : index
    %c0_39 = arith.constant 0 : index
    %59 = vector.load %arg3[%c0_38, %c0_39] : memref<128x128xf32, #tpu.memory_space<vmem>>, vector<128x128xf32>
    %cst_40 = arith.constant dense<0.000000e+00> : vector<8x128xf32>
    %60 = tpu.matmul %50, %59, %cst_40 {dimension_numbers = #tpu.dot_dimension_numbers<[1], [0], [0], [1], [0, 0, 1, 1], [], []>} : vector<8x128xf32>, vector<128x128xf32>, vector<8x128xf32> -> vector<8x128xf32>
    %61 = arith.addf %58, %60 : vector<8x128xf32>
    %62 = math.tanh %61 : vector<8x128xf32>
    %63 = arith.index_cast %c4_i32 : i32 to index
    %c0_41 = arith.constant 0 : index
    %c0_42 = arith.constant 0 : index
    %64 = vector.load %arg8[%63, %c0_41, %c0_42] : memref<8x8x128xf32, #tpu.memory_space<vmem>>, vector<1x8x128xf32>
    %65 = vector.shape_cast %64 : vector<1x8x128xf32> to vector<8x128xf32>
    %66 = vector.shape_cast %62 : vector<8x128xf32> to vector<1x8x128xf32>
    tpu.vector_store %arg8[%63, %c0_41, %c0_42], %66 {strides = array<i32>} : memref<8x8x128xf32, #tpu.memory_space<vmem>>, vector<1x8x128xf32>,
    %c5_i32 = arith.constant 5 : i32
    %67 = arith.index_cast %c5_i32 : i32 to index
    %c0_43 = arith.constant 0 : index
    %c0_44 = arith.constant 0 : index
    %68 = vector.load %arg7[%67, %c0_43, %c0_44] : memref<8x8x128xbf16, #tpu.memory_space<vmem>>, vector<1x8x128xbf16>
    %69 = vector.shape_cast %68 : vector<1x8x128xbf16> to vector<8x128xbf16>
    %70 = arith.extf %69 : vector<8x128xbf16> to vector<8x128xf32>
    %c0_45 = arith.constant 0 : index
    %c0_46 = arith.constant 0 : index
    %71 = vector.load %arg3[%c0_45, %c0_46] : memref<128x128xf32, #tpu.memory_space<vmem>>, vector<128x128xf32>
    %cst_47 = arith.constant dense<0.000000e+00> : vector<8x128xf32>
    %72 = tpu.matmul %62, %71, %cst_47 {dimension_numbers = #tpu.dot_dimension_numbers<[1], [0], [0], [1], [0, 0, 1, 1], [], []>} : vector<8x128xf32>, vector<128x128xf32>, vector<8x128xf32> -> vector<8x128xf32>
    %73 = arith.addf %70, %72 : vector<8x128xf32>
    %74 = math.tanh %73 : vector<8x128xf32>
    %75 = arith.index_cast %c5_i32 : i32 to index
    %c0_48 = arith.constant 0 : index
    %c0_49 = arith.constant 0 : index
    %76 = vector.load %arg8[%75, %c0_48, %c0_49] : memref<8x8x128xf32, #tpu.memory_space<vmem>>, vector<1x8x128xf32>
    %77 = vector.shape_cast %76 : vector<1x8x128xf32> to vector<8x128xf32>
    %78 = vector.shape_cast %74 : vector<8x128xf32> to vector<1x8x128xf32>
    tpu.vector_store %arg8[%75, %c0_48, %c0_49], %78 {strides = array<i32>} : memref<8x8x128xf32, #tpu.memory_space<vmem>>, vector<1x8x128xf32>,
    %c6_i32 = arith.constant 6 : i32
    %79 = arith.index_cast %c6_i32 : i32 to index
    %c0_50 = arith.constant 0 : index
    %c0_51 = arith.constant 0 : index
    %80 = vector.load %arg7[%79, %c0_50, %c0_51] : memref<8x8x128xbf16, #tpu.memory_space<vmem>>, vector<1x8x128xbf16>
    %81 = vector.shape_cast %80 : vector<1x8x128xbf16> to vector<8x128xbf16>
    %82 = arith.extf %81 : vector<8x128xbf16> to vector<8x128xf32>
    %c0_52 = arith.constant 0 : index
    %c0_53 = arith.constant 0 : index
    %83 = vector.load %arg3[%c0_52, %c0_53] : memref<128x128xf32, #tpu.memory_space<vmem>>, vector<128x128xf32>
    %cst_54 = arith.constant dense<0.000000e+00> : vector<8x128xf32>
    %84 = tpu.matmul %74, %83, %cst_54 {dimension_numbers = #tpu.dot_dimension_numbers<[1], [0], [0], [1], [0, 0, 1, 1], [], []>} : vector<8x128xf32>, vector<128x128xf32>, vector<8x128xf32> -> vector<8x128xf32>
    %85 = arith.addf %82, %84 : vector<8x128xf32>
    %86 = math.tanh %85 : vector<8x128xf32>
    %87 = arith.index_cast %c6_i32 : i32 to index
    %c0_55 = arith.constant 0 : index
    %c0_56 = arith.constant 0 : index
    %88 = vector.load %arg8[%87, %c0_55, %c0_56] : memref<8x8x128xf32, #tpu.memory_space<vmem>>, vector<1x8x128xf32>
    %89 = vector.shape_cast %88 : vector<1x8x128xf32> to vector<8x128xf32>
    %90 = vector.shape_cast %86 : vector<8x128xf32> to vector<1x8x128xf32>
    tpu.vector_store %arg8[%87, %c0_55, %c0_56], %90 {strides = array<i32>} : memref<8x8x128xf32, #tpu.memory_space<vmem>>, vector<1x8x128xf32>,
    %c7_i32 = arith.constant 7 : i32
    %91 = arith.index_cast %c7_i32 : i32 to index
    %c0_57 = arith.constant 0 : index
    %c0_58 = arith.constant 0 : index
    %92 = vector.load %arg7[%91, %c0_57, %c0_58] : memref<8x8x128xbf16, #tpu.memory_space<vmem>>, vector<1x8x128xbf16>
    %93 = vector.shape_cast %92 : vector<1x8x128xbf16> to vector<8x128xbf16>
    %94 = arith.extf %93 : vector<8x128xbf16> to vector<8x128xf32>
    %c0_59 = arith.constant 0 : index
    %c0_60 = arith.constant 0 : index
    %95 = vector.load %arg3[%c0_59, %c0_60] : memref<128x128xf32, #tpu.memory_space<vmem>>, vector<128x128xf32>
    %cst_61 = arith.constant dense<0.000000e+00> : vector<8x128xf32>
    %96 = tpu.matmul %86, %95, %cst_61 {dimension_numbers = #tpu.dot_dimension_numbers<[1], [0], [0], [1], [0, 0, 1, 1], [], []>} : vector<8x128xf32>, vector<128x128xf32>, vector<8x128xf32> -> vector<8x128xf32>
    %97 = arith.addf %94, %96 : vector<8x128xf32>
    %98 = math.tanh %97 : vector<8x128xf32>
    %99 = arith.index_cast %c7_i32 : i32 to index
    %c0_62 = arith.constant 0 : index
    %c0_63 = arith.constant 0 : index
    %100 = vector.load %arg8[%99, %c0_62, %c0_63] : memref<8x8x128xf32, #tpu.memory_space<vmem>>, vector<1x8x128xf32>
    %101 = vector.shape_cast %100 : vector<1x8x128xf32> to vector<8x128xf32>
    %102 = vector.shape_cast %98 : vector<8x128xf32> to vector<1x8x128xf32>
    tpu.vector_store %arg8[%99, %c0_62, %c0_63], %102 {strides = array<i32>} : memref<8x8x128xf32, #tpu.memory_space<vmem>>, vector<1x8x128xf32>,
    %c8_i32 = arith.constant 8 : i32
    %c0_64 = arith.constant 0 : index
    %c0_65 = arith.constant 0 : index
    %103 = vector.load %arg6[%c0_64, %c0_65] : memref<8x128xf32, #tpu.memory_space<vmem>>, vector<8x128xf32>
    tpu.vector_store %arg6[%c0_64, %c0_65], %98 {strides = array<i32>} : memref<8x128xf32, #tpu.memory_space<vmem>>, vector<8x128xf32>,
    %c0_66 = arith.constant 0 : index
    %c0_67 = arith.constant 0 : index
    %c0_68 = arith.constant 0 : index
    %104 = vector.load %arg8[%c0_66, %c0_67, %c0_68] : memref<8x8x128xf32, #tpu.memory_space<vmem>>, vector<8x8x128xf32>
    %105 = tpu.transpose %104, [1, 0, 2] : vector<8x8x128xf32> -> vector<8x8x128xf32>
    %c0_69 = arith.constant 0 : index
    %c0_70 = arith.constant 0 : index
    %c0_71 = arith.constant 0 : index
    %106 = vector.load %arg4[%c0_69, %c0_70, %c0_71] : memref<8x8x128xf32, #tpu.memory_space<vmem>>, vector<8x8x128xf32>
    tpu.vector_store %arg4[%c0_69, %c0_70, %c0_71], %105 {strides = array<i32>} : memref<8x8x128xf32, #tpu.memory_space<vmem>>, vector<8x8x128xf32>,
    %c0_i32_72 = arith.constant 0 : i32
    %107 = arith.cmpi eq, %arg0, %c0_i32_72 : i32
    %108 = arith.extui %107 : i1 to i32
    %c0_i32_73 = arith.constant 0 : i32
    %109 = arith.cmpi ne, %108, %c0_i32_73 : i32
    scf.if %109 {
      %c0_74 = arith.constant 0 : index
      %c0_75 = arith.constant 0 : index
      %110 = vector.load %arg5[%c0_74, %c0_75] : memref<8x128xf32, #tpu.memory_space<vmem>>, vector<8x128xf32>
      tpu.vector_store %arg5[%c0_74, %c0_75], %98 {strides = array<i32>} : memref<8x128xf32, #tpu.memory_space<vmem>>, vector<8x128xf32>,
    } else {
    }
    return
  }
  func.func @transform_0(%arg0: i32) -> (i32, i32, i32) {
    %c0_i32 = arith.constant 0 : i32
    %c0_i32_0 = arith.constant 0 : i32
    %c0_i32_1 = arith.constant 0 : i32
    return %c0_i32, %arg0, %c0_i32_0 : i32, i32, i32
  }
  func.func @transform_1(%arg0: i32) -> (i32, i32) {
    %c0_i32 = arith.constant 0 : i32
    %c0_i32_0 = arith.constant 0 : i32
    %c0_i32_1 = arith.constant 0 : i32
    return %c0_i32, %c0_i32_0 : i32, i32
  }
  func.func @transform_2(%arg0: i32) -> (i32, i32) {
    %c0_i32 = arith.constant 0 : i32
    %c0_i32_0 = arith.constant 0 : i32
    %c0_i32_1 = arith.constant 0 : i32
    return %c0_i32, %c0_i32_0 : i32, i32
  }
  func.func @transform_3(%arg0: i32) -> (i32, i32, i32) {
    %c0_i32 = arith.constant 0 : i32
    %c0_i32_0 = arith.constant 0 : i32
    %c0_i32_1 = arith.constant 0 : i32
    return %c0_i32, %arg0, %c0_i32_0 : i32, i32, i32
  }
  func.func @transform_4(%arg0: i32) -> (i32, i32) {
    %c0_i32 = arith.constant 0 : i32
    %c0_i32_0 = arith.constant 0 : i32
    %c0_i32_1 = arith.constant 0 : i32
    return %c0_i32, %c0_i32_0 : i32, i32
  }
}

</mosaic_0001>

<llo_original>
// kernel: tpu_custom_call.1
$region0: #{tpu_custom_call.1}
  #allocation0 [shape = 'u32[]', space=smem, size = 0x4, offset = 0x4, fixed_abs, tag = 'smem constant byte address 0x4 - core index']
  #allocation1 [shape = 'u32[72,128]{1,0:T(1,128)}', space=vmem, size = 0x9000, scoped, tag = 'internal scratch']
  #allocation2 [shape = 'f32[8,128]{1,0:T(8,128)}', space=vmem, size = 0x1000, scoped, tag = 'scratch operand']
  #allocation3 [shape = 'bf16[8,8,128]{2,1,0:T(8,128)(2,1)}', space=vmem, size = 0x4000, scoped, tag = 'scratch operand']
  #allocation4 [shape = 'f32[8,8,128]{2,1,0:T(8,128)}', space=vmem, size = 0x8000, scoped, tag = 'scratch operand']
  %s0 = inlined_call_operand.hbm [shape: bf16[8,8,128], index: 0, kind: input, shape index: {}]
  %s1 = inlined_call_operand.hbm [shape: f32[8,128], index: 1, kind: input, shape index: {}]
  %s2 = inlined_call_operand.hbm [shape: f32[128,128], index: 2, kind: input, shape index: {}]
  %s3 = inlined_call_operand.hbm [shape: f32[8,8,128], index: 3, kind: output, shape index: {0}]
  %s4 = inlined_call_operand.hbm [shape: f32[8,128], index: 4, kind: output, shape index: {1}]
  %5 = xla_tuple %s3, %s4
  %s6 = sld [smem:[#allocation0]]
  $region50: #{tpu_custom_call.1} parent=0
    _
  %s8 = ssub.s32 1, %s6
  %s9 = scalar_select 0, %s8, %s6
  $region1: #{tpu_custom_call.1} parent=0
    #allocation5 [shape = 'u8[16384]{0}', space=vmem, size = 0x4000, scoped, tag = 'input window, operand 0, single buffered']
    #allocation6 [shape = 's32[1]{0}', space=sflag, size = 0x4, scoped, tag = 'scoped memory for tpu_custom_call.1']
    #allocation7 [shape = 's32[1]{0}', space=sflag, size = 0x4, scoped, tag = 'scoped memory for tpu_custom_call.1']
    #allocation8 [shape = 'u8[4096]{0}', space=vmem, size = 0x1000, scoped, tag = 'input window, operand 1, single buffered']
    #allocation9 [shape = 's32[1]{0}', space=sflag, size = 0x4, scoped, tag = 'scoped memory for tpu_custom_call.1']
    #allocation10 [shape = 'u8[65536]{0}', space=vmem, size = 0x10000, scoped, tag = 'input window, operand 2, single buffered']
    #allocation11 [shape = 'u8[32768]{0}', space=vmem, size = 0x8000, scoped, tag = 'output window, operand 0, single buffered']
    #allocation12 [shape = 'u8[4096]{0}', space=vmem, size = 0x1000, scoped, tag = 'output window, operand 1, single buffered']
    #allocation13 [shape = 's32[1]{0}', space=sflag, size = 0x4, scoped, tag = 'scoped memory for tpu_custom_call.1']
    %10 = vsyncpa [#allocation6], 0
    %11 = vsyncpa [#allocation9], 0
    %12 = vsyncpa [#allocation7], 0
    %13 = vsyncpa [#allocation13], 0
    // Predicated region
    $region2: #{tpu_custom_call.1} parent=1 // pred_check
      _
    $region3: #{tpu_custom_call.1} parent=1 // pred_check_branch
      %15 = sbr.rel (0) target = $region5
    $region4: #{tpu_custom_call.1} parent=1 // pred_region
      %17 = vsyncadd [#allocation6], 0
      %s18 = sshll.u32 %s0, 4
      %s19 = int_to_ptr.hbm [resolvable:$true] %s18
      %s20 = sshll.u32 [#allocation5], 4
      %s21 = int_to_ptr.vmem [resolvable:$true] %s20
      %26 = dma.hbm_to_vmem [thread:$0]  %s19, 512, %s21, [#allocation6], 64, 64, 4
    $region5: #{tpu_custom_call.1} parent=1 // pred_fallthru
      _
    // Predicated region
    $region6: #{tpu_custom_call.1} parent=1 // pred_check
      _
    $region7: #{tpu_custom_call.1} parent=1 // pred_check_branch
      %28 = sbr.rel (0) target = $region9
    $region8: #{tpu_custom_call.1} parent=1 // pred_region
      %30 = vsyncadd [#allocation9], 0
      %s32 = sshll.u32 %s1, 4
      %s33 = int_to_ptr.hbm [resolvable:$true] %s32
      %s34 = sshll.u32 [#allocation8], 4
      %s35 = int_to_ptr.vmem [resolvable:$true] %s34
      %37 = dma.hbm_to_vmem [thread:$0]  %s33, 128, %s35, [#allocation9]
    $region9: #{tpu_custom_call.1} parent=1 // pred_fallthru
      _
    // Predicated region
    $region10: #{tpu_custom_call.1} parent=1 // pred_check
      _
    $region11: #{tpu_custom_call.1} parent=1 // pred_check_branch
      %39 = sbr.rel (0) target = $region13
    $region12: #{tpu_custom_call.1} parent=1 // pred_region
      %41 = vsyncadd [#allocation9], 0
      %s42 = sshll.u32 %s2, 4
      %s43 = int_to_ptr.hbm [resolvable:$true] %s42
      %s44 = sshll.u32 [#allocation10], 4
      %s45 = int_to_ptr.vmem [resolvable:$true] %s44
      %50 = dma.hbm_to_vmem [thread:$0]  %s43, 2048, %s45, [#allocation9], 128, 128, 8
    $region13: #{tpu_custom_call.1} parent=1 // pred_fallthru
      _
    // Predicated region
    $region14: #{tpu_custom_call.1} parent=1 // pred_check
      _
    $region15: #{tpu_custom_call.1} parent=1 // pred_check_branch
      %52 = sbr.rel (0) target = $region17
    $region16: #{tpu_custom_call.1} parent=1 // pred_region
      %54 = dma.done [#allocation6], 512
    $region17: #{tpu_custom_call.1} parent=1 // pred_fallthru
      _
    // Predicated region
    $region18: #{tpu_custom_call.1} parent=1 // pred_check
      _
    $region19: #{tpu_custom_call.1} parent=1 // pred_check_branch
      %56 = sbr.rel (0) target = $region21
    $region20: #{tpu_custom_call.1} parent=1 // pred_region
      %58 = dma.done [#allocation9], 128
    $region21: #{tpu_custom_call.1} parent=1 // pred_fallthru
      _
    // Predicated region
    $region22: #{tpu_custom_call.1} parent=1 // pred_check
      _
    $region23: #{tpu_custom_call.1} parent=1 // pred_check_branch
      %60 = sbr.rel (0) target = $region25
    $region24: #{tpu_custom_call.1} parent=1 // pred_region
      %62 = dma.done [#allocation9], 2048
    $region25: #{tpu_custom_call.1} parent=1 // pred_fallthru
      _
    %p64 = scmp.eq.s32.totalorder 0, 0
    // Predicated region
    $region26: #{tpu_custom_call.1} parent=1 // pred_check
      %p65 = pneg %p64
    $region27: #{tpu_custom_call.1} parent=1 // pred_check_branch
      %67 = sbr.rel (%p65) target = $region29
    $region28: #{tpu_custom_call.1} parent=1 // pred_region
      %v68 = vld [vmem:[#allocation8] sm:$0xff]
      %69 = vst [vmem:[#allocation2] sm:$0xff] %v68
    $region29: #{tpu_custom_call.1} parent=1 // pred_fallthru
      _
    %v70 = vld [vmem:[#allocation5] sm:$0xf]
    %v71 = vld [vmem:[#allocation5 + $0x4] sm:$0xf]
    %v72 = vld [vmem:[#allocation5 + $0x8] sm:$0xf]
    %v73 = vld [vmem:[#allocation5 + $0xc] sm:$0xf]
    %v74 = vld [vmem:[#allocation5 + $0x10] sm:$0xf]
    %v75 = vld [vmem:[#allocation5 + $0x14] sm:$0xf]
    %v76 = vld [vmem:[#allocation5 + $0x18] sm:$0xf]
    %v77 = vld [vmem:[#allocation5 + $0x1c] sm:$0xf]
    %v78 = vrot.slane %v74, 4
    %vm79 = vcmask 1047556
    %v80 = vsel %vm79, %v78, %v70
    %v82 = vunpack.c.l.s4 1983009808
    %v83 = vunpack.c.0.s8 %v82
    %v84 = vperm.slane %v80, %v83
    %v85 = vrot.slane %v76, 4
    %v86 = vsel %vm79, %v85, %v72
    %v88 = vunpack.c.l.s4 1983009808
    %v89 = vunpack.c.0.s8 %v88
    %v90 = vperm.slane %v86, %v89
    %v91 = vrot.slane %v90, 4
    %v92 = vsel %vm79, %v91, %v84
    %v93 = vrot.slane %v84, 4
    %v94 = vsel %vm79, %v90, %v93
    %v96 = vunpack.c.l.s4 1934713408
    %v97 = vunpack.c.0.s8 %v96
    %v98 = vperm.slane %v92, %v97
    %v100 = vunpack.c.l.s4 1934713408
    %v101 = vunpack.c.0.s8 %v100
    %v102 = vperm.slane %v94, %v101
    %v103 = vrot.slane %v98, 4
    %v104 = vsel %vm79, 0, %v103
    %v105 = vrot.slane %v102, 4
    %v106 = vsel %vm79, 0, %v105
    %v107 = vrot.slane %v75, 4
    %v108 = vsel %vm79, %v107, %v71
    %v110 = vunpack.c.l.s4 1983009808
    %v111 = vunpack.c.0.s8 %v110
    %v112 = vperm.slane %v108, %v111
    %v113 = vrot.slane %v77, 4
    %v114 = vsel %vm79, %v113, %v73
    %v116 = vunpack.c.l.s4 1983009808
    %v117 = vunpack.c.0.s8 %v116
    %v118 = vperm.slane %v114, %v117
    %v119 = vrot.slane %v118, 4
    %v120 = vsel %vm79, %v119, %v112
    %v121 = vrot.slane %v112, 4
    %v122 = vsel %vm79, %v118, %v121
    %v124 = vunpack.c.l.s4 1934713408
    %v125 = vunpack.c.0.s8 %v124
    %v126 = vperm.slane %v120, %v125
    %v128 = vunpack.c.l.s4 1934713408
    %v129 = vunpack.c.0.s8 %v128
    %v130 = vperm.slane %v122, %v129
    %v131 = vrot.slane %v126, 4
    %v132 = vsel %vm79, 0, %v131
    %v133 = vrot.slane %v130, 4
    %v134 = vsel %vm79, 0, %v133
    %v137 = vpack.i.b16 %v126, %v98
    %v139 = vshrl.u32 %v98, 16
    %v140 = vshrl.u32 %v126, 16
    %v141 = vpack.i.b16 %v140, %v139
    %v145 = vpack.i.b16 %v132, %v104
    %v147 = vshrl.u32 %v104, 16
    %v148 = vshrl.u32 %v132, 16
    %v149 = vpack.i.b16 %v148, %v147
    %v153 = vpack.i.b16 %v130, %v102
    %v155 = vshrl.u32 %v102, 16
    %v156 = vshrl.u32 %v130, 16
    %v157 = vpack.i.b16 %v156, %v155
    %v161 = vpack.i.b16 %v134, %v106
    %v163 = vshrl.u32 %v106, 16
    %v164 = vshrl.u32 %v134, 16
    %v165 = vpack.i.b16 %v164, %v163
    %167 = vst [vmem:[#allocation3] sm:$0xf] %v137
    %168 = vst [vmem:[#allocation3 + $0x4] sm:$0xf] %v141
    %169 = vst [vmem:[#allocation3 + $0x8] sm:$0xf] %v145
    %170 = vst [vmem:[#allocation3 + $0xc] sm:$0xf] %v149
    %171 = vst [vmem:[#allocation3 + $0x10] sm:$0xf] %v153
    %172 = vst [vmem:[#allocation3 + $0x14] sm:$0xf] %v157
    %173 = vst [vmem:[#allocation3 + $0x18] sm:$0xf] %v161
    %174 = vst [vmem:[#allocation3 + $0x1c] sm:$0xf] %v165
    %v175 = vld [vmem:[#allocation2] sm:$0xff]
    %v176 = vld [vmem:[#allocation3] sm:$0xf]
    %v177 = vunpack.c.l.bf16 %v176
    %v178 = vld [vmem:[#allocation10] sm:$0xff]
    %v179 = vld [vmem:[#allocation10 + $0x8] sm:$0xff]
    %v180 = vld [vmem:[#allocation10 + $0x10] sm:$0xff]
    %v181 = vld [vmem:[#allocation10 + $0x18] sm:$0xff]
    %v182 = vld [vmem:[#allocation10 + $0x20] sm:$0xff]
    %v183 = vld [vmem:[#allocation10 + $0x28] sm:$0xff]
    %v184 = vld [vmem:[#allocation10 + $0x30] sm:$0xff]
    %v185 = vld [vmem:[#allocation10 + $0x38] sm:$0xff]
    %v186 = vld [vmem:[#allocation10 + $0x40] sm:$0xff]
    %v187 = vld [vmem:[#allocation10 + $0x48] sm:$0xff]
    %v188 = vld [vmem:[#allocation10 + $0x50] sm:$0xff]
    %v189 = vld [vmem:[#allocation10 + $0x58] sm:$0xff]
    %v190 = vld [vmem:[#allocation10 + $0x60] sm:$0xff]
    %v191 = vld [vmem:[#allocation10 + $0x68] sm:$0xff]
    %v192 = vld [vmem:[#allocation10 + $0x70] sm:$0xff]
    %v193 = vld [vmem:[#allocation10 + $0x78] sm:$0xff]
    %194 = vmatpush.msra.mxu0 %v193
    %195 = vmatpush.msra.mxu0 %v192
    %196 = vmatpush.msra.mxu0 %v191
    %197 = vmatpush.msra.mxu0 %v190
    %198 = vmatpush.msra.mxu0 %v189
    %199 = vmatpush.msra.mxu0 %v188
    %200 = vmatpush.msra.mxu0 %v187
    %201 = vmatpush.msra.mxu0 %v186
    %202 = vmatpush.msra.mxu0 %v185
    %203 = vmatpush.msra.mxu0 %v184
    %204 = vmatpush.msra.mxu0 %v183
    %205 = vmatpush.msra.mxu0 %v182
    %206 = vmatpush.msra.mxu0 %v181
    %207 = vmatpush.msra.mxu0 %v180
    %208 = vmatpush.msra.mxu0 %v179
    %209 = vmatpush.msra.mxu0 %v178
    %210 = vmatmul.f32.gmra.mxu0 %v175
    %v211 = vpop.f32.mrf.mxu0
    %v212 = vadd.f32 0.0, %v211
    %213 = vdwg.mxu0
    %v214 = vadd.f32 %v177, %v212
    %v215 = vtanh.pop %v214
    %216 = vst [vmem:[#allocation4] sm:$0xff] %v215
    %s217 = scalar_lea.vmem [#allocation3], 4
    %v218 = vld [vmem:[%s217] sm:$0xf]
    %v219 = vunpack.c.l.bf16 %v218
    %v220 = vld [vmem:[#allocation10] sm:$0xff]
    %v221 = vld [vmem:[#allocation10 + $0x8] sm:$0xff]
    %v222 = vld [vmem:[#allocation10 + $0x10] sm:$0xff]
    %v223 = vld [vmem:[#allocation10 + $0x18] sm:$0xff]
    %v224 = vld [vmem:[#allocation10 + $0x20] sm:$0xff]
    %v225 = vld [vmem:[#allocation10 + $0x28] sm:$0xff]
    %v226 = vld [vmem:[#allocation10 + $0x30] sm:$0xff]
    %v227 = vld [vmem:[#allocation10 + $0x38] sm:$0xff]
    %v228 = vld [vmem:[#allocation10 + $0x40] sm:$0xff]
    %v229 = vld [vmem:[#allocation10 + $0x48] sm:$0xff]
    %v230 = vld [vmem:[#allocation10 + $0x50] sm:$0xff]
    %v231 = vld [vmem:[#allocation10 + $0x58] sm:$0xff]
    %v232 = vld [vmem:[#allocation10 + $0x60] sm:$0xff]
    %v233 = vld [vmem:[#allocation10 + $0x68] sm:$0xff]
    %v234 = vld [vmem:[#allocation10 + $0x70] sm:$0xff]
    %v235 = vld [vmem:[#allocation10 + $0x78] sm:$0xff]
    %236 = vmatpush.msra.mxu0 %v235
    %237 = vmatpush.msra.mxu0 %v234
    %238 = vmatpush.msra.mxu0 %v233
    %239 = vmatpush.msra.mxu0 %v232
    %240 = vmatpush.msra.mxu0 %v231
    %241 = vmatpush.msra.mxu0 %v230
    %242 = vmatpush.msra.mxu0 %v229
    %243 = vmatpush.msra.mxu0 %v228
    %244 = vmatpush.msra.mxu0 %v227
    %245 = vmatpush.msra.mxu0 %v226
    %246 = vmatpush.msra.mxu0 %v225
    %247 = vmatpush.msra.mxu0 %v224
    %248 = vmatpush.msra.mxu0 %v223
    %249 = vmatpush.msra.mxu0 %v222
    %250 = vmatpush.msra.mxu0 %v221
    %251 = vmatpush.msra.mxu0 %v220
    %252 = vmatmul.f32.gmra.mxu0 %v215
    %v253 = vpop.f32.mrf.mxu0
    %v254 = vadd.f32 0.0, %v253
    %255 = vdwg.mxu0
    %v256 = vadd.f32 %v219, %v254
    %v257 = vtanh.pop %v256
    %s258 = scalar_lea.vmem [#allocation4], 8
    %259 = vst [vmem:[%s258] sm:$0xff] %v257
    %s260 = scalar_lea.vmem [#allocation3], 8
    %v261 = vld [vmem:[%s260] sm:$0xf]
    %v262 = vunpack.c.l.bf16 %v261
    %v263 = vld [vmem:[#allocation10] sm:$0xff]
    %v264 = vld [vmem:[#allocation10 + $0x8] sm:$0xff]
    %v265 = vld [vmem:[#allocation10 + $0x10] sm:$0xff]
    %v266 = vld [vmem:[#allocation10 + $0x18] sm:$0xff]
    %v267 = vld [vmem:[#allocation10 + $0x20] sm:$0xff]
    %v268 = vld [vmem:[#allocation10 + $0x28] sm:$0xff]
    %v269 = vld [vmem:[#allocation10 + $0x30] sm:$0xff]
    %v270 = vld [vmem:[#allocation10 + $0x38] sm:$0xff]
    %v271 = vld [vmem:[#allocation10 + $0x40] sm:$0xff]
    %v272 = vld [vmem:[#allocation10 + $0x48] sm:$0xff]
    %v273 = vld [vmem:[#allocation10 + $0x50] sm:$0xff]
    %v274 = vld [vmem:[#allocation10 + $0x58] sm:$0xff]
    %v275 = vld [vmem:[#allocation10 + $0x60] sm:$0xff]
    %v276 = vld [vmem:[#allocation10 + $0x68] sm:$0xff]
    %v277 = vld [vmem:[#allocation10 + $0x70] sm:$0xff]
    %v278 = vld [vmem:[#allocation10 + $0x78] sm:$0xff]
    %279 = vmatpush.msra.mxu0 %v278
    %280 = vmatpush.msra.mxu0 %v277
    %281 = vmatpush.msra.mxu0 %v276
    %282 = vmatpush.msra.mxu0 %v275
    %283 = vmatpush.msra.mxu0 %v274
    %284 = vmatpush.msra.mxu0 %v273
    %285 = vmatpush.msra.mxu0 %v272
    %286 = vmatpush.msra.mxu0 %v271
    %287 = vmatpush.msra.mxu0 %v270
    %288 = vmatpush.msra.mxu0 %v269
    %289 = vmatpush.msra.mxu0 %v268
    %290 = vmatpush.msra.mxu0 %v267
    %291 = vmatpush.msra.mxu0 %v266
    %292 = vmatpush.msra.mxu0 %v265
    %293 = vmatpush.msra.mxu0 %v264
    %294 = vmatpush.msra.mxu0 %v263
    %295 = vmatmul.f32.gmra.mxu0 %v257
    %v296 = vpop.f32.mrf.mxu0
    %v297 = vadd.f32 0.0, %v296
    %298 = vdwg.mxu0
    %v299 = vadd.f32 %v262, %v297
    %v300 = vtanh.pop %v299
    %s301 = scalar_lea.vmem [#allocation4], 16
    %302 = vst [vmem:[%s301] sm:$0xff] %v300
    %s303 = scalar_lea.vmem [#allocation3], 12
    %v304 = vld [vmem:[%s303] sm:$0xf]
    %v305 = vunpack.c.l.bf16 %v304
    %v306 = vld [vmem:[#allocation10] sm:$0xff]
    %v307 = vld [vmem:[#allocation10 + $0x8] sm:$0xff]
    %v308 = vld [vmem:[#allocation10 + $0x10] sm:$0xff]
    %v309 = vld [vmem:[#allocation10 + $0x18] sm:$0xff]
    %v310 = vld [vmem:[#allocation10 + $0x20] sm:$0xff]
    %v311 = vld [vmem:[#allocation10 + $0x28] sm:$0xff]
    %v312 = vld [vmem:[#allocation10 + $0x30] sm:$0xff]
    %v313 = vld [vmem:[#allocation10 + $0x38] sm:$0xff]
    %v314 = vld [vmem:[#allocation10 + $0x40] sm:$0xff]
    %v315 = vld [vmem:[#allocation10 + $0x48] sm:$0xff]
    %v316 = vld [vmem:[#allocation10 + $0x50] sm:$0xff]
    %v317 = vld [vmem:[#allocation10 + $0x58] sm:$0xff]
    %v318 = vld [vmem:[#allocation10 + $0x60] sm:$0xff]
    %v319 = vld [vmem:[#allocation10 + $0x68] sm:$0xff]
    %v320 = vld [vmem:[#allocation10 + $0x70] sm:$0xff]
    %v321 = vld [vmem:[#allocation10 + $0x78] sm:$0xff]
    %322 = vmatpush.msra.mxu0 %v321
    %323 = vmatpush.msra.mxu0 %v320
    %324 = vmatpush.msra.mxu0 %v319
    %325 = vmatpush.msra.mxu0 %v318
    %326 = vmatpush.msra.mxu0 %v317
    %327 = vmatpush.msra.mxu0 %v316
    %328 = vmatpush.msra.mxu0 %v315
    %329 = vmatpush.msra.mxu0 %v314
    %330 = vmatpush.msra.mxu0 %v313
    %331 = vmatpush.msra.mxu0 %v312
    %332 = vmatpush.msra.mxu0 %v311
    %333 = vmatpush.msra.mxu0 %v310
    %334 = vmatpush.msra.mxu0 %v309
    %335 = vmatpush.msra.mxu0 %v308
    %336 = vmatpush.msra.mxu0 %v307
    %337 = vmatpush.msra.mxu0 %v306
    %338 = vmatmul.f32.gmra.mxu0 %v300
    %v339 = vpop.f32.mrf.mxu0
    %v340 = vadd.f32 0.0, %v339
    %341 = vdwg.mxu0
    %v342 = vadd.f32 %v305, %v340
    %v343 = vtanh.pop %v342
    %s344 = scalar_lea.vmem [#allocation4], 24
    %345 = vst [vmem:[%s344] sm:$0xff] %v343
    %s346 = scalar_lea.vmem [#allocation3], 16
    %v347 = vld [vmem:[%s346] sm:$0xf]
    %v348 = vunpack.c.l.bf16 %v347
    %v349 = vld [vmem:[#allocation10] sm:$0xff]
    %v350 = vld [vmem:[#allocation10 + $0x8] sm:$0xff]
    %v351 = vld [vmem:[#allocation10 + $0x10] sm:$0xff]
    %v352 = vld [vmem:[#allocation10 + $0x18] sm:$0xff]
    %v353 = vld [vmem:[#allocation10 + $0x20] sm:$0xff]
    %v354 = vld [vmem:[#allocation10 + $0x28] sm:$0xff]
    %v355 = vld [vmem:[#allocation10 + $0x30] sm:$0xff]
    %v356 = vld [vmem:[#allocation10 + $0x38] sm:$0xff]
    %v357 = vld [vmem:[#allocation10 + $0x40] sm:$0xff]
    %v358 = vld [vmem:[#allocation10 + $0x48] sm:$0xff]
    %v359 = vld [vmem:[#allocation10 + $0x50] sm:$0xff]
    %v360 = vld [vmem:[#allocation10 + $0x58] sm:$0xff]
    %v361 = vld [vmem:[#allocation10 + $0x60] sm:$0xff]
    %v362 = vld [vmem:[#allocation10 + $0x68] sm:$0xff]
    %v363 = vld [vmem:[#allocation10 + $0x70] sm:$0xff]
    %v364 = vld [vmem:[#allocation10 + $0x78] sm:$0xff]
    %365 = vmatpush.msra.mxu0 %v364
    %366 = vmatpush.msra.mxu0 %v363
    %367 = vmatpush.msra.mxu0 %v362
    %368 = vmatpush.msra.mxu0 %v361
    %369 = vmatpush.msra.mxu0 %v360
    %370 = vmatpush.msra.mxu0 %v359
    %371 = vmatpush.msra.mxu0 %v358
    %372 = vmatpush.msra.mxu0 %v357
    %373 = vmatpush.msra.mxu0 %v356
    %374 = vmatpush.msra.mxu0 %v355
    %375 = vmatpush.msra.mxu0 %v354
    %376 = vmatpush.msra.mxu0 %v353
    %377 = vmatpush.msra.mxu0 %v352
    %378 = vmatpush.msra.mxu0 %v351
    %379 = vmatpush.msra.mxu0 %v350
    %380 = vmatpush.msra.mxu0 %v349
    %381 = vmatmul.f32.gmra.mxu0 %v343
    %v382 = vpop.f32.mrf.mxu0
    %v383 = vadd.f32 0.0, %v382
    %384 = vdwg.mxu0
    %v385 = vadd.f32 %v348, %v383
    %v386 = vtanh.pop %v385
    %s387 = scalar_lea.vmem [#allocation4], 32
    %388 = vst [vmem:[%s387] sm:$0xff] %v386
    %s389 = scalar_lea.vmem [#allocation3], 20
    %v390 = vld [vmem:[%s389] sm:$0xf]
    %v391 = vunpack.c.l.bf16 %v390
    %v392 = vld [vmem:[#allocation10] sm:$0xff]
    %v393 = vld [vmem:[#allocation10 + $0x8] sm:$0xff]
    %v394 = vld [vmem:[#allocation10 + $0x10] sm:$0xff]
    %v395 = vld [vmem:[#allocation10 + $0x18] sm:$0xff]
    %v396 = vld [vmem:[#allocation10 + $0x20] sm:$0xff]
    %v397 = vld [vmem:[#allocation10 + $0x28] sm:$0xff]
    %v398 = vld [vmem:[#allocation10 + $0x30] sm:$0xff]
    %v399 = vld [vmem:[#allocation10 + $0x38] sm:$0xff]
    %v400 = vld [vmem:[#allocation10 + $0x40] sm:$0xff]
    %v401 = vld [vmem:[#allocation10 + $0x48] sm:$0xff]
    %v402 = vld [vmem:[#allocation10 + $0x50] sm:$0xff]
    %v403 = vld [vmem:[#allocation10 + $0x58] sm:$0xff]
    %v404 = vld [vmem:[#allocation10 + $0x60] sm:$0xff]
    %v405 = vld [vmem:[#allocation10 + $0x68] sm:$0xff]
    %v406 = vld [vmem:[#allocation10 + $0x70] sm:$0xff]
    %v407 = vld [vmem:[#allocation10 + $0x78] sm:$0xff]
    %408 = vmatpush.msra.mxu0 %v407
    %409 = vmatpush.msra.mxu0 %v406
    %410 = vmatpush.msra.mxu0 %v405
    %411 = vmatpush.msra.mxu0 %v404
    %412 = vmatpush.msra.mxu0 %v403
    %413 = vmatpush.msra.mxu0 %v402
    %414 = vmatpush.msra.mxu0 %v401
    %415 = vmatpush.msra.mxu0 %v400
    %416 = vmatpush.msra.mxu0 %v399
    %417 = vmatpush.msra.mxu0 %v398
    %418 = vmatpush.msra.mxu0 %v397
    %419 = vmatpush.msra.mxu0 %v396
    %420 = vmatpush.msra.mxu0 %v395
    %421 = vmatpush.msra.mxu0 %v394
    %422 = vmatpush.msra.mxu0 %v393
    %423 = vmatpush.msra.mxu0 %v392
    %424 = vmatmul.f32.gmra.mxu0 %v386
    %v425 = vpop.f32.mrf.mxu0
    %v426 = vadd.f32 0.0, %v425
    %427 = vdwg.mxu0
    %v428 = vadd.f32 %v391, %v426
    %v429 = vtanh.pop %v428
    %s430 = scalar_lea.vmem [#allocation4], 40
    %431 = vst [vmem:[%s430] sm:$0xff] %v429
    %s432 = scalar_lea.vmem [#allocation3], 24
    %v433 = vld [vmem:[%s432] sm:$0xf]
    %v434 = vunpack.c.l.bf16 %v433
    %v435 = vld [vmem:[#allocation10] sm:$0xff]
    %v436 = vld [vmem:[#allocation10 + $0x8] sm:$0xff]
    %v437 = vld [vmem:[#allocation10 + $0x10] sm:$0xff]
    %v438 = vld [vmem:[#allocation10 + $0x18] sm:$0xff]
    %v439 = vld [vmem:[#allocation10 + $0x20] sm:$0xff]
    %v440 = vld [vmem:[#allocation10 + $0x28] sm:$0xff]
    %v441 = vld [vmem:[#allocation10 + $0x30] sm:$0xff]
    %v442 = vld [vmem:[#allocation10 + $0x38] sm:$0xff]
    %v443 = vld [vmem:[#allocation10 + $0x40] sm:$0xff]
    %v444 = vld [vmem:[#allocation10 + $0x48] sm:$0xff]
    %v445 = vld [vmem:[#allocation10 + $0x50] sm:$0xff]
    %v446 = vld [vmem:[#allocation10 + $0x58] sm:$0xff]
    %v447 = vld [vmem:[#allocation10 + $0x60] sm:$0xff]
    %v448 = vld [vmem:[#allocation10 + $0x68] sm:$0xff]
    %v449 = vld [vmem:[#allocation10 + $0x70] sm:$0xff]
    %v450 = vld [vmem:[#allocation10 + $0x78] sm:$0xff]
    %451 = vmatpush.msra.mxu0 %v450
    %452 = vmatpush.msra.mxu0 %v449
    %453 = vmatpush.msra.mxu0 %v448
    %454 = vmatpush.msra.mxu0 %v447
    %455 = vmatpush.msra.mxu0 %v446
    %456 = vmatpush.msra.mxu0 %v445
    %457 = vmatpush.msra.mxu0 %v444
    %458 = vmatpush.msra.mxu0 %v443
    %459 = vmatpush.msra.mxu0 %v442
    %460 = vmatpush.msra.mxu0 %v441
    %461 = vmatpush.msra.mxu0 %v440
    %462 = vmatpush.msra.mxu0 %v439
    %463 = vmatpush.msra.mxu0 %v438
    %464 = vmatpush.msra.mxu0 %v437
    %465 = vmatpush.msra.mxu0 %v436
    %466 = vmatpush.msra.mxu0 %v435
    %467 = vmatmul.f32.gmra.mxu0 %v429
    %v468 = vpop.f32.mrf.mxu0
    %v469 = vadd.f32 0.0, %v468
    %470 = vdwg.mxu0
    %v471 = vadd.f32 %v434, %v469
    %v472 = vtanh.pop %v471
    %s473 = scalar_lea.vmem [#allocation4], 48
    %474 = vst [vmem:[%s473] sm:$0xff] %v472
    %s475 = scalar_lea.vmem [#allocation3], 28
    %v476 = vld [vmem:[%s475] sm:$0xf]
    %v477 = vunpack.c.l.bf16 %v476
    %v478 = vld [vmem:[#allocation10] sm:$0xff]
    %v479 = vld [vmem:[#allocation10 + $0x8] sm:$0xff]
    %v480 = vld [vmem:[#allocation10 + $0x10] sm:$0xff]
    %v481 = vld [vmem:[#allocation10 + $0x18] sm:$0xff]
    %v482 = vld [vmem:[#allocation10 + $0x20] sm:$0xff]
    %v483 = vld [vmem:[#allocation10 + $0x28] sm:$0xff]
    %v484 = vld [vmem:[#allocation10 + $0x30] sm:$0xff]
    %v485 = vld [vmem:[#allocation10 + $0x38] sm:$0xff]
    %v486 = vld [vmem:[#allocation10 + $0x40] sm:$0xff]
    %v487 = vld [vmem:[#allocation10 + $0x48] sm:$0xff]
    %v488 = vld [vmem:[#allocation10 + $0x50] sm:$0xff]
    %v489 = vld [vmem:[#allocation10 + $0x58] sm:$0xff]
    %v490 = vld [vmem:[#allocation10 + $0x60] sm:$0xff]
    %v491 = vld [vmem:[#allocation10 + $0x68] sm:$0xff]
    %v492 = vld [vmem:[#allocation10 + $0x70] sm:$0xff]
    %v493 = vld [vmem:[#allocation10 + $0x78] sm:$0xff]
    %494 = vmatpush.msra.mxu0 %v493
    %495 = vmatpush.msra.mxu0 %v492
    %496 = vmatpush.msra.mxu0 %v491
    %497 = vmatpush.msra.mxu0 %v490
    %498 = vmatpush.msra.mxu0 %v489
    %499 = vmatpush.msra.mxu0 %v488
    %500 = vmatpush.msra.mxu0 %v487
    %501 = vmatpush.msra.mxu0 %v486
    %502 = vmatpush.msra.mxu0 %v485
    %503 = vmatpush.msra.mxu0 %v484
    %504 = vmatpush.msra.mxu0 %v483
    %505 = vmatpush.msra.mxu0 %v482
    %506 = vmatpush.msra.mxu0 %v481
    %507 = vmatpush.msra.mxu0 %v480
    %508 = vmatpush.msra.mxu0 %v479
    %509 = vmatpush.msra.mxu0 %v478
    %510 = vmatmul.f32.gmra.mxu0 %v472
    %v511 = vpop.f32.mrf.mxu0
    %v512 = vadd.f32 0.0, %v511
    %513 = vdwg.mxu0
    %v514 = vadd.f32 %v477, %v512
    %v515 = vtanh.pop %v514
    %s516 = scalar_lea.vmem [#allocation4], 56
    %517 = vst [vmem:[%s516] sm:$0xff] %v515
    %518 = vst [vmem:[#allocation2] sm:$0xff] %v515
    %v519 = vld [vmem:[#allocation4] sm:$0xff]
    %v520 = vld [vmem:[#allocation4 + $0x8] sm:$0xff]
    %v521 = vld [vmem:[#allocation4 + $0x10] sm:$0xff]
    %v522 = vld [vmem:[#allocation4 + $0x18] sm:$0xff]
    %v523 = vld [vmem:[#allocation4 + $0x20] sm:$0xff]
    %v524 = vld [vmem:[#allocation4 + $0x28] sm:$0xff]
    %v525 = vld [vmem:[#allocation4 + $0x30] sm:$0xff]
    %v526 = vld [vmem:[#allocation4 + $0x38] sm:$0xff]
    %v527 = vrot.slane %v521, 4
    %vm528 = vcmask 1047556
    %v529 = vsel %vm528, %v527, %v519
    %v530 = vrot.slane %v519, 4
    %v531 = vsel %vm528, %v521, %v530
    %v533 = vunpack.c.l.s4 1983009808
    %v534 = vunpack.c.0.s8 %v533
    %v535 = vperm.slane %v529, %v534
    %v537 = vunpack.c.l.s4 1983009808
    %v538 = vunpack.c.0.s8 %v537
    %v539 = vperm.slane %v531, %v538
    %v540 = vrot.slane %v522, 4
    %v541 = vsel %vm528, %v540, %v520
    %v542 = vrot.slane %v520, 4
    %v543 = vsel %vm528, %v522, %v542
    %v545 = vunpack.c.l.s4 1983009808
    %v546 = vunpack.c.0.s8 %v545
    %v547 = vperm.slane %v541, %v546
    %v549 = vunpack.c.l.s4 1983009808
    %v550 = vunpack.c.0.s8 %v549
    %v551 = vperm.slane %v543, %v550
    %v552 = vrot.slane %v525, 4
    %v553 = vsel %vm528, %v552, %v523
    %v554 = vrot.slane %v523, 4
    %v555 = vsel %vm528, %v525, %v554
    %v557 = vunpack.c.l.s4 1983009808
    %v558 = vunpack.c.0.s8 %v557
    %v559 = vperm.slane %v553, %v558
    %v561 = vunpack.c.l.s4 1983009808
    %v562 = vunpack.c.0.s8 %v561
    %v563 = vperm.slane %v555, %v562
    %v564 = vrot.slane %v526, 4
    %v565 = vsel %vm528, %v564, %v524
    %v566 = vrot.slane %v524, 4
    %v567 = vsel %vm528, %v526, %v566
    %v569 = vunpack.c.l.s4 1983009808
    %v570 = vunpack.c.0.s8 %v569
    %v571 = vperm.slane %v565, %v570
    %v573 = vunpack.c.l.s4 1983009808
    %v574 = vunpack.c.0.s8 %v573
    %v575 = vperm.slane %v567, %v574
    %v576 = vrot.slane %v547, 4
    %v577 = vsel %vm528, %v576, %v535
    %v578 = vrot.slane %v535, 4
    %v579 = vsel %vm528, %v547, %v578
    %v581 = vunpack.c.l.s4 1934713408
    %v582 = vunpack.c.0.s8 %v581
    %v583 = vperm.slane %v577, %v582
    %v585 = vunpack.c.l.s4 1934713408
    %v586 = vunpack.c.0.s8 %v585
    %v587 = vperm.slane %v579, %v586
    %v588 = vrot.slane %v551, 4
    %v589 = vsel %vm528, %v588, %v539
    %v590 = vrot.slane %v539, 4
    %v591 = vsel %vm528, %v551, %v590
    %v593 = vunpack.c.l.s4 1934713408
    %v594 = vunpack.c.0.s8 %v593
    %v595 = vperm.slane %v589, %v594
    %v597 = vunpack.c.l.s4 1934713408
    %v598 = vunpack.c.0.s8 %v597
    %v599 = vperm.slane %v591, %v598
    %v600 = vrot.slane %v571, 4
    %v601 = vsel %vm528, %v600, %v559
    %v602 = vrot.slane %v559, 4
    %v603 = vsel %vm528, %v571, %v602
    %v605 = vunpack.c.l.s4 1934713408
    %v606 = vunpack.c.0.s8 %v605
    %v607 = vperm.slane %v601, %v606
    %v609 = vunpack.c.l.s4 1934713408
    %v610 = vunpack.c.0.s8 %v609
    %v611 = vperm.slane %v603, %v610
    %v612 = vrot.slane %v575, 4
    %v613 = vsel %vm528, %v612, %v563
    %v614 = vrot.slane %v563, 4
    %v615 = vsel %vm528, %v575, %v614
    %v617 = vunpack.c.l.s4 1934713408
    %v618 = vunpack.c.0.s8 %v617
    %v619 = vperm.slane %v613, %v618
    %v621 = vunpack.c.l.s4 1934713408
    %v622 = vunpack.c.0.s8 %v621
    %v623 = vperm.slane %v615, %v622
    %v624 = vrot.slane %v607, 4
    %v625 = vsel %vm528, %v624, %v583
    %v626 = vrot.slane %v583, 4
    %v627 = vsel %vm528, %v607, %v626
    %v628 = vrot.slane %v611, 4
    %v629 = vsel %vm528, %v628, %v587
    %v630 = vrot.slane %v587, 4
    %v631 = vsel %vm528, %v611, %v630
    %v632 = vrot.slane %v619, 4
    %v633 = vsel %vm528, %v632, %v595
    %v634 = vrot.slane %v595, 4
    %v635 = vsel %vm528, %v619, %v634
    %v636 = vrot.slane %v623, 4
    %v637 = vsel %vm528, %v636, %v599
    %v638 = vrot.slane %v599, 4
    %v639 = vsel %vm528, %v623, %v638
    %640 = vst [vmem:[#allocation11] sm:$0xff] %v625
    %641 = vst [vmem:[#allocation11 + $0x8] sm:$0xff] %v627
    %642 = vst [vmem:[#allocation11 + $0x10] sm:$0xff] %v629
    %643 = vst [vmem:[#allocation11 + $0x18] sm:$0xff] %v631
    %644 = vst [vmem:[#allocation11 + $0x20] sm:$0xff] %v633
    %645 = vst [vmem:[#allocation11 + $0x28] sm:$0xff] %v635
    %646 = vst [vmem:[#allocation11 + $0x30] sm:$0xff] %v637
    %647 = vst [vmem:[#allocation11 + $0x38] sm:$0xff] %v639
    // Predicated region
    $region30: #{tpu_custom_call.1} parent=1 // pred_check
      %p648 = pneg %p64
    $region31: #{tpu_custom_call.1} parent=1 // pred_check_branch
      %650 = sbr.rel (%p648) target = $region33
    $region32: #{tpu_custom_call.1} parent=1 // pred_region
      %651 = vst [vmem:[#allocation12] sm:$0xff] %v515
    $region33: #{tpu_custom_call.1} parent=1 // pred_fallthru
      _
    // Predicated region
    $region34: #{tpu_custom_call.1} parent=1 // pred_check
      _
    $region35: #{tpu_custom_call.1} parent=1 // pred_check_branch
      %653 = sbr.rel (0) target = $region37
    $region36: #{tpu_custom_call.1} parent=1 // pred_region
      %655 = vsyncadd [#allocation7], 0
      %s656 = sshll.u32 [#allocation11], 4
      %s657 = int_to_ptr.vmem [resolvable:$true] %s656
      %s658 = sshll.u32 %s3, 4
      %s659 = int_to_ptr.hbm [resolvable:$true] %s658
      %664 = dma.vmem_to_hbm [thread:$0]  %s657, 1024, %s659, [#allocation7], 128, 128, 8
    $region37: #{tpu_custom_call.1} parent=1 // pred_fallthru
      _
    // Predicated region
    $region38: #{tpu_custom_call.1} parent=1 // pred_check
      _
    $region39: #{tpu_custom_call.1} parent=1 // pred_check_branch
      %666 = sbr.rel (0) target = $region41
    $region40: #{tpu_custom_call.1} parent=1 // pred_region
      %668 = vsyncadd [#allocation13], 0
      %s670 = sshll.u32 [#allocation12], 4
      %s671 = int_to_ptr.vmem [resolvable:$true] %s670
      %s672 = sshll.u32 %s4, 4
      %s673 = int_to_ptr.hbm [resolvable:$true] %s672
      %675 = dma.vmem_to_hbm [thread:$0]  %s671, 128, %s673, [#allocation13]
    $region41: #{tpu_custom_call.1} parent=1 // pred_fallthru
      _
    // Predicated region
    $region42: #{tpu_custom_call.1} parent=1 // pred_check
      _
    $region43: #{tpu_custom_call.1} parent=1 // pred_check_branch
      %677 = sbr.rel (0) target = $region45
    $region44: #{tpu_custom_call.1} parent=1 // pred_region
      %679 = dma.done [#allocation7], 1024
    $region45: #{tpu_custom_call.1} parent=1 // pred_fallthru
      _
    // Predicated region
    $region46: #{tpu_custom_call.1} parent=1 // pred_check
      _
    $region47: #{tpu_custom_call.1} parent=1 // pred_check_branch
      %681 = sbr.rel (0) target = $region49
    $region48: #{tpu_custom_call.1} parent=1 // pred_region
      %683 = dma.done [#allocation13], 128
    $region49: #{tpu_custom_call.1} parent=1 // pred_fallthru
      _
    %684 = vsyncpa [#allocation6], 1
    %685 = vsyncpa [#allocation9], 1
    %686 = vsyncpa [#allocation7], 1
    %687 = vsyncpa [#allocation13], 1

</llo_original>
